<compile_context>
chip_gen: v5e
topology: v5e:2x2
jax: 0.10.0
libtpu: 0.0.40
codegen_flags: <defaults>
</compile_context>

<pallas_src>
import functools

import jax
import jax.numpy as jnp
from jax import lax
from jax.experimental import pallas as pl
from jax.experimental.pallas import tpu as pltpu


def _round_up(n: int, m: int) -> int:
    return ((n + m - 1) // m) * m


def _supports_bf16_vectorunits() -> bool:
    """bf16 VPU / EUP exist on v6e and v7x; v5e and older lack them."""
    try:
        kind = jax.devices()[0].device_kind.lower()
    except Exception:
        return False
    return not any(v in kind for v in ("v2", "v3", "v4", "v5"))


def _derived_vmem_limit(tile_b, D, H, x_itemsize, w1_itemsize, h_itemsize):
    """Shape-derived scoped-VMEM limit (bytes)."""
    weights = D * H * w1_itemsize + 2 * H * 4       # W1 (single-buffered) + b1 + w2 rows
    x_tiles = 2 * tile_b * D * x_itemsize           # double-buffered streamed x tile
    h_interm = tile_b * H * max(h_itemsize, 4)      # activation intermediate (f32 bound)
    out = 2 * tile_b * 4                            # double-buffered (1, tile_b) output
    need = int((weights + x_tiles + h_interm + out) * 1.5) + (4 << 20)  # headroom
    # v5e/v6e have 128 MiB physical VMEM, v7x 64 MiB; shapes needing > ~100 MiB
    # don't fit v7x anyway, so a 100 MiB cap is safe on all generations.
    return max(32 << 20, min(need, 100 << 20))


def _energy_kernel(x_ref, w1_ref, b1_ref, w2_ref, b2_ref, o_ref, *, h_dtype):
    # In-kernel cast of x to the matmul input dtype (bf16 on the production
    # path): a VPU cast riding a free VALU slot — keeps x's HBM traffic to one
    # pass instead of a separate wrapper-side astype.
    x = x_ref[...].astype(w1_ref.dtype)

    # First layer on the MXU: (tile_b, D) @ (D, H), f32 accumulation.
    h = jnp.dot(x, w1_ref[...], preferred_element_type=jnp.float32)
    h = h + b1_ref[...]                        # (1, H) broadcast bias add (VPU, f32)
    h = jax.nn.sigmoid(h.astype(h_dtype))      # EUP; bf16 on v6e/v7x halves the intermediate

    # Second layer: contract over H with w2 as a (1, H) row, producing the
    # lane-dense (1, tile_b) energy row directly (same dimension numbers as an
    # attention q·kᵀ).  Avoids a degenerate N=1 MXU column and a masked
    # (tile_b, 1) store.
    s = lax.dot_general(
        w2_ref[...].astype(h_dtype), h,
        dimension_numbers=(((1,), (1,)), ((), ())),
        preferred_element_type=jnp.float32,
    )                                          # (1, tile_b), f32
    o_ref[...] = (s + b2_ref[0]).astype(o_ref.dtype)   # b2: scalar read from SMEM


def energy_function(x, w1, b1, w2, b2, *, tile_b: int = 1024,
                    use_bf16_matmul: bool = True, use_bf16_h=None):
    """x: (B, D) -> (B, 1), equivalent to Linear(D,4D) |> Sigmoid |> Linear(4D,1)."""
    orig_dtype = x.dtype
    B, D = x.shape
    H = w1.shape[1]
    assert w1.shape == (D, H) and w2.shape[0] == H

    if use_bf16_matmul:
        if w1.dtype != jnp.bfloat16:
            # NOTE: prefer pre-casting W1 once outside the per-call path and
            # passing the persistent bf16 copy in, so this never runs per call.
            w1 = w1.astype(jnp.bfloat16)
        bf16_h = use_bf16_h if use_bf16_h is not None else _supports_bf16_vectorunits()
        h_dtype = jnp.bfloat16 if bf16_h else jnp.float32
    else:
        w1 = w1.astype(jnp.float32)
        h_dtype = jnp.float32

    # ---- batch tiling -------------------------------------------------------
    if B < 128:
        # Tiny batch: single un-padded step. Padding to 128 rows would multiply
        # x traffic / MXU work by up to 16x for data that is sliced away.
        tile_b = B
        b_pad = B
    else:
        b128 = _round_up(B, 128)
        tile_b = max(128, min(_round_up(tile_b, 128), b128))
        if b128 >= 2 * 128:
            # Guarantee >= 2 grid steps (>= 4 if tiles can stay >= 512 rows) so
            # both v7x TensorCores get work and the pipeline can overlap.
            steps = 4 if b128 >= 4 * 512 else 2
            tile_b = min(tile_b, _round_up(pl.cdiv(b128, steps), 128))
        b_pad = _round_up(B, tile_b)

    if b_pad != B:
        x = jnp.pad(x, ((0, b_pad - B), (0, 0)))   # x keeps its dtype; cast is in-kernel

    b1_row = b1.reshape(1, H).astype(jnp.float32)
    w2_row = w2.reshape(1, H).astype(jnp.float32)
    b2_vec = b2.reshape(1).astype(jnp.float32)      # scalar, lives in SMEM

    vmem_limit = _derived_vmem_limit(
        tile_b, D, H,
        jnp.dtype(x.dtype).itemsize,
        jnp.dtype(w1.dtype).itemsize,
        jnp.dtype(h_dtype).itemsize,
    )

    grid = (b_pad // tile_b,)
    kernel = functools.partial(_energy_kernel, h_dtype=h_dtype)

    def build(weight_mode):
        def wspec(shape):
            if weight_mode is None:
                return pl.BlockSpec(shape, lambda i: (0, 0))
            return pl.BlockSpec(shape, lambda i: (0, 0), pipeline_mode=weight_mode)

        return pl.pallas_call(
            kernel,
            out_shape=jax.ShapeDtypeStruct((1, b_pad), jnp.float32),
            grid=grid,
            in_specs=[
                # x: streamed over the batch axis.
                pl.BlockSpec((tile_b, D), lambda i: (i, 0)),
                # Weights / biases: constant index map -> resident, not re-DMA'd.
                wspec((D, H)),
                wspec((1, H)),
                wspec((1, H)),
                # b2: scalar on the SMEM path (no padded VMEM tile for one float).
                pl.BlockSpec(memory_space=pltpu.MemorySpace.SMEM),
            ],
            # Lane-dense output: per-tile (1, tile_b) row, batch on lanes.
            out_specs=pl.BlockSpec((1, tile_b), lambda i: (0, i)),
            compiler_params=pltpu.CompilerParams(
                dimension_semantics=("parallel",),   # both TCs on v7x
                vmem_limit_bytes=vmem_limit,
            ),
        )

    args = (x, w1, b1_row, w2_row, b2_vec)
    try:
        # Single-buffer the resident operands (index maps are constant, so a
        # second buffer is pure VMEM waste — matters most on v7x's 64 MiB/TC).
        out_row = build(pl.Buffered(1))(*args)
    except Exception:
        # Fallback for jax versions that reject buffer_count=1.
        out_row = build(None)(*args)

    # Wrapper-side layout fixup: (1, b_pad) lane-dense row -> (B, 1) column.
    return out_row[0, :B].reshape(B, 1).astype(orig_dtype)


def _reference(x, w1, b1, w2, b2):
    h = jax.nn.sigmoid(x @ w1 + b1.reshape(1, -1))
    return h @ w2 + b2.reshape(1, 1)


if __name__ == "__main__":
    # Small shapes consistent with EnergyFunction(input_dim=32)
    B, D = 8, 32
    H = D * 4  # 128

    key = jax.random.PRNGKey(0)
    kx, kw1, kb1, kw2, kb2 = jax.random.split(key, 5)

    x = jax.random.normal(kx, (B, D), dtype=jnp.float32)
    # Deterministic parameter init (synthetic, roughly matching nn.Linear scale)
    w1 = jax.random.uniform(kw1, (D, H), jnp.float32, -1.0, 1.0) / jnp.sqrt(D)
    b1 = jax.random.uniform(kb1, (H,), jnp.float32, -1.0, 1.0) / jnp.sqrt(D)
    w2 = jax.random.uniform(kw2, (H, 1), jnp.float32, -1.0, 1.0) / jnp.sqrt(H)
    b2 = jax.random.uniform(kb2, (1,), jnp.float32, -1.0, 1.0) / jnp.sqrt(H)

    ref = _reference(x, w1, b1, w2, b2)

    # 1) Exact f32 path (reference tolerance), tiny un-padded batch.
    out_f32 = jax.block_until_ready(
        energy_function(x, w1, b1, w2, b2, use_bf16_matmul=False))
    assert out_f32.shape == (B, 1)
    assert jnp.allclose(out_f32, ref, atol=1e-5, rtol=1e-5), (
        f"f32 mismatch: max abs err {jnp.max(jnp.abs(out_f32 - ref))}")

    # 2) Exact f32 path through the tiled/padded multi-step grid (exercises the
    #    batch tiling, padding and lane-dense output slicing).
    Bg = 384
    xg = jax.random.normal(jax.random.PRNGKey(1), (Bg, D), dtype=jnp.float32)
    refg = _reference(xg, w1, b1, w2, b2)
    outg = jax.block_until_ready(
        energy_function(xg, w1, b1, w2, b2, use_bf16_matmul=False))
    assert outg.shape == (Bg, 1)
    assert jnp.allclose(outg, refg, atol=1e-5, rtol=1e-5), (
        f"grid-path mismatch: max abs err {jnp.max(jnp.abs(outg - refg))}")

    # 3) Production default: bf16 MXU inputs (W1 pre-cast once / persistent),
    #    f32 accumulation. Looser tolerance due to bf16 input quantization.
    w1_bf16 = w1.astype(jnp.bfloat16)   # persistent pre-cast, reused across calls
    out_bf16 = jax.block_until_ready(
        energy_function(x, w1_bf16, b1, w2, b2))   # use_bf16_matmul=True default
    assert out_bf16.shape == (B, 1)
    assert jnp.allclose(out_bf16, ref, atol=5e-2, rtol=5e-2), (
        f"bf16 mismatch: max abs err {jnp.max(jnp.abs(out_bf16 - ref))}")

    print("KERNEL_OK")
</pallas_src>

<mosaic_0001>
module attributes {stable_mosaic.version = 11 : i64} {
  func.func @_energy_kernel(%arg0: i32, %arg1: memref<8x32xf32, #tpu.memory_space<vmem>>, %arg2: memref<32x128xf32, #tpu.memory_space<vmem>>, %arg3: memref<1x128xf32, #tpu.memory_space<vmem>>, %arg4: memref<1x128xf32, #tpu.memory_space<vmem>>, %arg5: memref<1xf32, #tpu.memory_space<smem>>, %arg6: memref<1x8xf32, #tpu.memory_space<vmem>>) attributes {dimension_semantics = [#tpu.dimension_semantics<parallel>], iteration_bounds = array<i64: 1>, scalar_prefetch = 0 : i64, scratch_operands = 0 : i64, tpu.core_type = #tpu.core_type<tc>, window_params = [{transform_indices = @transform_0, window_bounds = array<i64: 8, 32>}, {pipeline_mode = #tpu.pipeline_mode<synchronous>, transform_indices = @transform_1, window_bounds = array<i64: 32, 128>}, {pipeline_mode = #tpu.pipeline_mode<synchronous>, transform_indices = @transform_2, window_bounds = array<i64: 1, 128>}, {pipeline_mode = #tpu.pipeline_mode<synchronous>, transform_indices = @transform_3, window_bounds = array<i64: 1, 128>}, {transform_indices = @transform_4, window_bounds = array<i64: 1>}, {transform_indices = @transform_5, window_bounds = array<i64: 1, 8>}]} {
    %c0 = arith.constant 0 : index
    %c0_0 = arith.constant 0 : index
    %0 = vector.load %arg1[%c0, %c0_0] : memref<8x32xf32, #tpu.memory_space<vmem>>, vector<8x32xf32>
    %c0_1 = arith.constant 0 : index
    %c0_2 = arith.constant 0 : index
    %1 = vector.load %arg2[%c0_1, %c0_2] : memref<32x128xf32, #tpu.memory_space<vmem>>, vector<32x128xf32>
    %cst = arith.constant dense<0.000000e+00> : vector<8x128xf32>
    %2 = tpu.matmul %0, %1, %cst {dimension_numbers = #tpu.dot_dimension_numbers<[1], [0], [0], [1], [0, 0, 1, 1], [], []>} : vector<8x32xf32>, vector<32x128xf32>, vector<8x128xf32> -> vector<8x128xf32>
    %c0_3 = arith.constant 0 : index
    %c0_4 = arith.constant 0 : index
    %3 = vector.load %arg3[%c0_3, %c0_4] : memref<1x128xf32, #tpu.memory_space<vmem>>, vector<1x128xf32>
    %4 = vector.broadcast %3 : vector<1x128xf32> to vector<8x128xf32>
    %5 = arith.addf %2, %4 : vector<8x128xf32>
    %6 = arith.negf %5 : vector<8x128xf32>
    %7 = math.exp %6 : vector<8x128xf32>
    %cst_5 = arith.constant 1.000000e+00 : f32
    %8 = vector.broadcast %cst_5 : f32 to vector<8x128xf32>
    %9 = arith.addf %8, %7 : vector<8x128xf32>
    %10 = arith.divf %8, %9 : vector<8x128xf32>
    %c0_6 = arith.constant 0 : index
    %c0_7 = arith.constant 0 : index
    %11 = vector.load %arg4[%c0_6, %c0_7] : memref<1x128xf32, #tpu.memory_space<vmem>>, vector<1x128xf32>
    %cst_8 = arith.constant dense<0.000000e+00> : vector<1x8xf32>
    %12 = tpu.matmul %11, %10, %cst_8 {dimension_numbers = #tpu.dot_dimension_numbers<[1], [1], [0], [0], [0, 0, 1, 0], [], []>} : vector<1x128xf32>, vector<8x128xf32>, vector<1x8xf32> -> vector<1x8xf32>
    %c0_9 = arith.constant 0 : index
    %13 = memref.load %arg5[%c0_9] : memref<1xf32, #tpu.memory_space<smem>>
    %14 = vector.broadcast %13 : f32 to vector<1x8xf32>
    %15 = arith.addf %12, %14 : vector<1x8xf32>
    %c0_10 = arith.constant 0 : index
    %c0_11 = arith.constant 0 : index
    %16 = vector.load %arg6[%c0_10, %c0_11] : memref<1x8xf32, #tpu.memory_space<vmem>>, vector<1x8xf32>
    tpu.vector_store %arg6[%c0_10, %c0_11], %15 {strides = array<i32>} : memref<1x8xf32, #tpu.memory_space<vmem>>, vector<1x8xf32>,
    return
  }
  func.func @transform_0(%arg0: i32) -> (i32, i32) {
    %c0_i32 = arith.constant 0 : i32
    %c0_i32_0 = arith.constant 0 : i32
    return %arg0, %c0_i32 : i32, i32
  }
  func.func @transform_1(%arg0: i32) -> (i32, i32) {
    %c0_i32 = arith.constant 0 : i32
    %c0_i32_0 = arith.constant 0 : i32
    %c0_i32_1 = arith.constant 0 : i32
    return %c0_i32, %c0_i32_0 : i32, i32
  }
  func.func @transform_2(%arg0: i32) -> (i32, i32) {
    %c0_i32 = arith.constant 0 : i32
    %c0_i32_0 = arith.constant 0 : i32
    %c0_i32_1 = arith.constant 0 : i32
    return %c0_i32, %c0_i32_0 : i32, i32
  }
  func.func @transform_3(%arg0: i32) -> (i32, i32) {
    %c0_i32 = arith.constant 0 : i32
    %c0_i32_0 = arith.constant 0 : i32
    %c0_i32_1 = arith.constant 0 : i32
    return %c0_i32, %c0_i32_0 : i32, i32
  }
  func.func @transform_4(%arg0: i32) -> i32 {
    %c0_i32 = arith.constant 0 : i32
    %c0_i32_0 = arith.constant 0 : i32
    return %c0_i32 : i32
  }
  func.func @transform_5(%arg0: i32) -> (i32, i32) {
    %c0_i32 = arith.constant 0 : i32
    %c0_i32_0 = arith.constant 0 : i32
    return %c0_i32, %arg0 : i32, i32
  }
}

module attributes {stable_mosaic.version = 11 : i64} {
  func.func @_energy_kernel(%arg0: i32, %arg1: memref<8x32xf32, #tpu.memory_space<vmem>>, %arg2: memref<32x128xf32, #tpu.memory_space<vmem>>, %arg3: memref<1x128xf32, #tpu.memory_space<vmem>>, %arg4: memref<1x128xf32, #tpu.memory_space<vmem>>, %arg5: memref<1xf32, #tpu.memory_space<smem>>, %arg6: memref<1x8xf32, #tpu.memory_space<vmem>>) attributes {dimension_semantics = [#tpu.dimension_semantics<parallel>], iteration_bounds = array<i64: 1>, scalar_prefetch = 0 : i64, scratch_operands = 0 : i64, tpu.core_type = #tpu.core_type<tc>, window_params = [{transform_indices = @transform_0, window_bounds = array<i64: 8, 32>}, {pipeline_mode = #tpu.pipeline_mode<synchronous>, transform_indices = @transform_1, window_bounds = array<i64: 32, 128>}, {pipeline_mode = #tpu.pipeline_mode<synchronous>, transform_indices = @transform_2, window_bounds = array<i64: 1, 128>}, {pipeline_mode = #tpu.pipeline_mode<synchronous>, transform_indices = @transform_3, window_bounds = array<i64: 1, 128>}, {transform_indices = @transform_4, window_bounds = array<i64: 1>}, {transform_indices = @transform_5, window_bounds = array<i64: 1, 8>}]} {
    %c0 = arith.constant 0 : index
    %c0_0 = arith.constant 0 : index
    %0 = vector.load %arg1[%c0, %c0_0] : memref<8x32xf32, #tpu.memory_space<vmem>>, vector<8x32xf32>
    %c0_1 = arith.constant 0 : index
    %c0_2 = arith.constant 0 : index
    %1 = vector.load %arg2[%c0_1, %c0_2] : memref<32x128xf32, #tpu.memory_space<vmem>>, vector<32x128xf32>
    %cst = arith.constant dense<0.000000e+00> : vector<8x128xf32>
    %2 = tpu.matmul %0, %1, %cst {dimension_numbers = #tpu.dot_dimension_numbers<[1], [0], [0], [1], [0, 0, 1, 1], [], []>} : vector<8x32xf32>, vector<32x128xf32>, vector<8x128xf32> -> vector<8x128xf32>
    %c0_3 = arith.constant 0 : index
    %c0_4 = arith.constant 0 : index
    %3 = vector.load %arg3[%c0_3, %c0_4] : memref<1x128xf32, #tpu.memory_space<vmem>>, vector<1x128xf32>
    %4 = vector.broadcast %3 : vector<1x128xf32> to vector<8x128xf32>
    %5 = arith.addf %2, %4 : vector<8x128xf32>
    %6 = arith.negf %5 : vector<8x128xf32>
    %7 = math.exp %6 : vector<8x128xf32>
    %cst_5 = arith.constant 1.000000e+00 : f32
    %8 = vector.broadcast %cst_5 : f32 to vector<8x128xf32>
    %9 = arith.addf %8, %7 : vector<8x128xf32>
    %10 = arith.divf %8, %9 : vector<8x128xf32>
    %c0_6 = arith.constant 0 : index
    %c0_7 = arith.constant 0 : index
    %11 = vector.load %arg4[%c0_6, %c0_7] : memref<1x128xf32, #tpu.memory_space<vmem>>, vector<1x128xf32>
    %cst_8 = arith.constant dense<0.000000e+00> : vector<1x8xf32>
    %12 = tpu.matmul %11, %10, %cst_8 {dimension_numbers = #tpu.dot_dimension_numbers<[1], [1], [0], [0], [0, 0, 1, 0], [], []>} : vector<1x128xf32>, vector<8x128xf32>, vector<1x8xf32> -> vector<1x8xf32>
    %c0_9 = arith.constant 0 : index
    %13 = memref.load %arg5[%c0_9] : memref<1xf32, #tpu.memory_space<smem>>
    %14 = vector.broadcast %13 : f32 to vector<1x8xf32>
    %15 = arith.addf %12, %14 : vector<1x8xf32>
    %c0_10 = arith.constant 0 : index
    %c0_11 = arith.constant 0 : index
    %16 = vector.load %arg6[%c0_10, %c0_11] : memref<1x8xf32, #tpu.memory_space<vmem>>, vector<1x8xf32>
    tpu.vector_store %arg6[%c0_10, %c0_11], %15 {strides = array<i32>} : memref<1x8xf32, #tpu.memory_space<vmem>>, vector<1x8xf32>,
    return
  }
  func.func @transform_0(%arg0: i32) -> (i32, i32) {
    %c0_i32 = arith.constant 0 : i32
    %c0_i32_0 = arith.constant 0 : i32
    return %arg0, %c0_i32 : i32, i32
  }
  func.func @transform_1(%arg0: i32) -> (i32, i32) {
    %c0_i32 = arith.constant 0 : i32
    %c0_i32_0 = arith.constant 0 : i32
    %c0_i32_1 = arith.constant 0 : i32
    return %c0_i32, %c0_i32_0 : i32, i32
  }
  func.func @transform_2(%arg0: i32) -> (i32, i32) {
    %c0_i32 = arith.constant 0 : i32
    %c0_i32_0 = arith.constant 0 : i32
    %c0_i32_1 = arith.constant 0 : i32
    return %c0_i32, %c0_i32_0 : i32, i32
  }
  func.func @transform_3(%arg0: i32) -> (i32, i32) {
    %c0_i32 = arith.constant 0 : i32
    %c0_i32_0 = arith.constant 0 : i32
    %c0_i32_1 = arith.constant 0 : i32
    return %c0_i32, %c0_i32_0 : i32, i32
  }
  func.func @transform_4(%arg0: i32) -> i32 {
    %c0_i32 = arith.constant 0 : i32
    %c0_i32_0 = arith.constant 0 : i32
    return %c0_i32 : i32
  }
  func.func @transform_5(%arg0: i32) -> (i32, i32) {
    %c0_i32 = arith.constant 0 : i32
    %c0_i32_0 = arith.constant 0 : i32
    return %c0_i32, %arg0 : i32, i32
  }
}

</mosaic_0001>

<llo_original>
// kernel: tpu_custom_call.1
$region0: #{tpu_custom_call.1}
  #allocation0 [shape = 'u32[]', space=smem, size = 0x4, offset = 0x4, fixed_abs, tag = 'smem constant byte address 0x4 - core index']
  #allocation1 [shape = 'u32[72,128]{1,0:T(1,128)}', space=vmem, size = 0x9000, scoped, tag = 'internal scratch']
  #allocation2 [shape = 'f32[1]{0:T(128)S(6)}', space=smem, size = 0x200, scoped, tag = 'scoped memory for tpu_custom_call.1']
  %s0 = inlined_call_operand.hbm [shape: f32[8,32], index: 0, kind: input, shape index: {}]
  %s1 = inlined_call_operand.hbm [shape: f32[32,128], index: 1, kind: input, shape index: {}]
  %s2 = inlined_call_operand.vmem [shape: f32[1,128], index: 2, kind: input, shape index: {}]
  %s3 = inlined_call_operand.vmem [shape: f32[1,128], index: 3, kind: input, shape index: {}]
  %s4 = inlined_call_operand.<no memory space> [shape: f32[1], index: 4, kind: input, shape index: {}]
  %s5 = inlined_call_operand.hbm [shape: f32[1,8], index: 5, kind: output, shape index: {}]
  %s6 = sld [smem:[#allocation0]]
  $region38: #{tpu_custom_call.1} parent=0
    _
  %s8 = ssub.s32 1, %s6
  %s9 = scalar_select 0, %s8, %s6
  %10 = sst [smem:[#allocation2]] %s4
  $region1: #{tpu_custom_call.1} parent=0
    #allocation3 [shape = 'u8[4096]{0}', space=vmem, size = 0x1000, scoped, tag = 'input window, operand 0, single buffered']
    #allocation4 [shape = 's32[1]{0}', space=sflag, size = 0x4, scoped, tag = 'scoped memory for tpu_custom_call.1']
    #allocation5 [shape = 's32[1]{0}', space=sflag, size = 0x4, scoped, tag = 'scoped memory for tpu_custom_call.1']
    #allocation6 [shape = 'u8[16384]{0}', space=vmem, size = 0x4000, scoped, tag = 'input window, operand 1, single buffered']
    #allocation7 [shape = 's32[1]{0}', space=sflag, size = 0x4, scoped, tag = 'scoped memory for tpu_custom_call.1']
    #allocation8 [shape = 'u8[512]{0}', space=vmem, size = 0x400, scoped, tag = 'output window, operand 0, single buffered']
    %11 = vsyncpa [#allocation4], 0
    %12 = vsyncpa [#allocation7], 0
    %13 = vsyncpa [#allocation5], 0
    // Predicated region
    $region2: #{tpu_custom_call.1} parent=1 // pred_check
      _
    $region3: #{tpu_custom_call.1} parent=1 // pred_check_branch
      %15 = sbr.rel (0) target = $region5
    $region4: #{tpu_custom_call.1} parent=1 // pred_region
      %17 = vsyncadd [#allocation4], 0
      %s19 = sshll.u32 %s0, 4
      %s20 = int_to_ptr.hbm [resolvable:$true] %s19
      %s21 = sshll.u32 [#allocation3], 4
      %s22 = int_to_ptr.vmem [resolvable:$true] %s21
      %24 = dma.hbm_to_vmem [thread:$0]  %s20, 128, %s22, [#allocation4]
    $region5: #{tpu_custom_call.1} parent=1 // pred_fallthru
      _
    // Predicated region
    $region6: #{tpu_custom_call.1} parent=1 // pred_check
      _
    $region7: #{tpu_custom_call.1} parent=1 // pred_check_branch
      %26 = sbr.rel (0) target = $region9
    $region8: #{tpu_custom_call.1} parent=1 // pred_region
      %28 = vsyncadd [#allocation7], 0
      %s29 = sshll.u32 %s1, 4
      %s30 = int_to_ptr.hbm [resolvable:$true] %s29
      %s31 = sshll.u32 [#allocation6], 4
      %s32 = int_to_ptr.vmem [resolvable:$true] %s31
      %37 = dma.hbm_to_vmem [thread:$0]  %s30, 512, %s32, [#allocation7], 128, 128, 8
    $region9: #{tpu_custom_call.1} parent=1 // pred_fallthru
      _
    // Predicated region
    $region10: #{tpu_custom_call.1} parent=1 // pred_check
      _
    $region11: #{tpu_custom_call.1} parent=1 // pred_check_branch
      %39 = sbr.rel (0) target = $region13
    $region12: #{tpu_custom_call.1} parent=1 // pred_region
      _
    $region13: #{tpu_custom_call.1} parent=1 // pred_fallthru
      _
    // Predicated region
    $region14: #{tpu_custom_call.1} parent=1 // pred_check
      _
    $region15: #{tpu_custom_call.1} parent=1 // pred_check_branch
      %41 = sbr.rel (0) target = $region17
    $region16: #{tpu_custom_call.1} parent=1 // pred_region
      _
    $region17: #{tpu_custom_call.1} parent=1 // pred_fallthru
      _
    // Predicated region
    $region18: #{tpu_custom_call.1} parent=1 // pred_check
      _
    $region19: #{tpu_custom_call.1} parent=1 // pred_check_branch
      %43 = sbr.rel (0) target = $region21
    $region20: #{tpu_custom_call.1} parent=1 // pred_region
      _
    $region21: #{tpu_custom_call.1} parent=1 // pred_fallthru
      _
    // Predicated region
    $region22: #{tpu_custom_call.1} parent=1 // pred_check
      _
    $region23: #{tpu_custom_call.1} parent=1 // pred_check_branch
      %45 = sbr.rel (0) target = $region25
    $region24: #{tpu_custom_call.1} parent=1 // pred_region
      %47 = dma.done [#allocation4], 128
    $region25: #{tpu_custom_call.1} parent=1 // pred_fallthru
      _
    // Predicated region
    $region26: #{tpu_custom_call.1} parent=1 // pred_check
      _
    $region27: #{tpu_custom_call.1} parent=1 // pred_check_branch
      %49 = sbr.rel (0) target = $region29
    $region28: #{tpu_custom_call.1} parent=1 // pred_region
      %51 = dma.done [#allocation7], 512
    $region29: #{tpu_custom_call.1} parent=1 // pred_fallthru
      _
    %v52 = vld [vmem:[#allocation3] sm:$0xff]
    %v53 = vld [vmem:[#allocation6] sm:$0xff]
    %v54 = vld [vmem:[#allocation6 + $0x8] sm:$0xff]
    %v55 = vld [vmem:[#allocation6 + $0x10] sm:$0xff]
    %v56 = vld [vmem:[#allocation6 + $0x18] sm:$0xff]
    %v57 = vld [vmem:[%s2] sm:$0x1]
    %v59 = vperm.slane %v57, 0
    %vm61 = vcmask 261120
    %v63 = vsel %vm61, %v52, 0
    %65 = vmatpush.msra.mxu0 0.0
    %66 = vmatpush.msra.mxu0 0.0
    %67 = vmatpush.msra.mxu0 0.0
    %68 = vmatpush.msra.mxu0 0.0
    %69 = vmatpush.msra.mxu0 0.0
    %70 = vmatpush.msra.mxu0 0.0
    %71 = vmatpush.msra.mxu0 0.0
    %72 = vmatpush.msra.mxu0 0.0
    %73 = vmatpush.msra.mxu0 0.0
    %74 = vmatpush.msra.mxu0 0.0
    %75 = vmatpush.msra.mxu0 0.0
    %76 = vmatpush.msra.mxu0 0.0
    %77 = vmatpush.msra.mxu0 %v56
    %78 = vmatpush.msra.mxu0 %v55
    %79 = vmatpush.msra.mxu0 %v54
    %80 = vmatpush.msra.mxu0 %v53
    %81 = vmatmul.f32.gmra.mxu0 %v63
    %v82 = vpop.f32.mrf.mxu0
    %v83 = vadd.f32 %v59, %v82
    %84 = vdwg.mxu0
    %v85 = vxor.u32 %v83, 2147483648
    %v86 = vmul.f32 %v85, 1.442695
    %v87 = vpow.pop %v86
    %v88 = vadd.f32 %v87, 1.0
    %v89 = vrcp.pop %v88
    %v90 = vmul.f32 %v88, %v89
    %v91 = vsub.f32 1.0, %v90
    %v92 = vmul.f32 %v89, %v91
    %v93 = vadd.f32 %v89, %v92
    %vm94 = vweird.f32 %v88
    %vm95 = vweird.f32 %v89
    %vm96 = vmor %vm94, %vm95
    %v97 = vsel %vm96, %v89, %v93
    %v98 = vand.u32 2147483647, %v88
    %vm99 = vcmp.eq.f32.partialorder %v98, 8.507059e+37
    %v100 = vand.u32 %v88, 2147483648
    %v101 = vor.u32 1.1754944e-38, %v100
    %v102 = vsel %vm99, %v101, %v97
    %v103 = vmul.f32 1.0, %v102
    %v104 = vld [vmem:[%s3] sm:$0x1]
    %s105 = sld [smem:[#allocation2]]
    %v106 = vstv %s105
    %107 = vmatpush.xpose.msra.mxu0 0.0
    %108 = vmatpush.xpose.msra.mxu0 0.0
    %109 = vmatpush.xpose.msra.mxu0 0.0
    %110 = vmatpush.xpose.msra.mxu0 0.0
    %111 = vmatpush.xpose.msra.mxu0 0.0
    %112 = vmatpush.xpose.msra.mxu0 0.0
    %113 = vmatpush.xpose.msra.mxu0 0.0
    %114 = vmatpush.xpose.msra.mxu0 0.0
    %115 = vmatpush.xpose.msra.mxu0 0.0
    %116 = vmatpush.xpose.msra.mxu0 0.0
    %117 = vmatpush.xpose.msra.mxu0 0.0
    %118 = vmatpush.xpose.msra.mxu0 0.0
    %119 = vmatpush.xpose.msra.mxu0 0.0
    %120 = vmatpush.xpose.msra.mxu0 0.0
    %121 = vmatpush.xpose.msra.mxu0 0.0
    %122 = vmatpush.xpose.msra.mxu0 %v103
    %123 = vmatmul.f32.gmra.mxu0 %v104
    %v124 = vpop.f32.mrf.mxu0
    %v125 = vadd.f32 %v106, %v124
    %126 = vdwg.mxu0
    %vm127 = vcmask 57344
    %128 = vst.msk [vmem:[#allocation8] sm:$0x1] %vm127, %v125
    // Predicated region
    $region30: #{tpu_custom_call.1} parent=1 // pred_check
      _
    $region31: #{tpu_custom_call.1} parent=1 // pred_check_branch
      %130 = sbr.rel (0) target = $region33
    $region32: #{tpu_custom_call.1} parent=1 // pred_region
      %132 = vsyncadd [#allocation5], 0
      %s134 = sshll.u32 [#allocation8], 4
      %s135 = int_to_ptr.vmem [resolvable:$true] %s134
      %s136 = sshll.u32 %s5, 4
      %s137 = int_to_ptr.hbm [resolvable:$true] %s136
      %139 = dma.vmem_to_hbm [thread:$0]  %s135, 16, %s137, [#allocation5]
    $region33: #{tpu_custom_call.1} parent=1 // pred_fallthru
      _
    // Predicated region
    $region34: #{tpu_custom_call.1} parent=1 // pred_check
      _
    $region35: #{tpu_custom_call.1} parent=1 // pred_check_branch
      %141 = sbr.rel (0) target = $region37
    $region36: #{tpu_custom_call.1} parent=1 // pred_region
      %143 = dma.done [#allocation5], 16
    $region37: #{tpu_custom_call.1} parent=1 // pred_fallthru
      _
    %144 = vsyncpa [#allocation4], 1
    %145 = vsyncpa [#allocation7], 1
    %146 = vsyncpa [#allocation5], 1

// kernel: tpu_custom_call.1
$region0: #{tpu_custom_call.1}
  #allocation0 [shape = 'u32[]', space=smem, size = 0x4, offset = 0x4, fixed_abs, tag = 'smem constant byte address 0x4 - core index']
  #allocation1 [shape = 'u32[72,128]{1,0:T(1,128)}', space=vmem, size = 0x9000, scoped, tag = 'internal scratch']
  #allocation2 [shape = 'f32[1]{0:T(128)S(6)}', space=smem, size = 0x200, scoped, tag = 'scoped memory for tpu_custom_call.1']
  %s0 = inlined_call_operand.hbm [shape: f32[8,32], index: 0, kind: input, shape index: {}]
  %s1 = inlined_call_operand.hbm [shape: f32[32,128], index: 1, kind: input, shape index: {}]
  %s2 = inlined_call_operand.vmem [shape: f32[1,128], index: 2, kind: input, shape index: {}]
  %s3 = inlined_call_operand.vmem [shape: f32[1,128], index: 3, kind: input, shape index: {}]
  %s4 = inlined_call_operand.<no memory space> [shape: f32[1], index: 4, kind: input, shape index: {}]
  %s5 = inlined_call_operand.hbm [shape: f32[1,8], index: 5, kind: output, shape index: {}]
  %s6 = sld [smem:[#allocation0]]
  $region38: #{tpu_custom_call.1} parent=0
    _
  %s8 = ssub.s32 1, %s6
  %s9 = scalar_select 0, %s8, %s6
  %10 = sst [smem:[#allocation2]] %s4
  $region1: #{tpu_custom_call.1} parent=0
    #allocation3 [shape = 'u8[4096]{0}', space=vmem, size = 0x1000, scoped, tag = 'input window, operand 0, single buffered']
    #allocation4 [shape = 's32[1]{0}', space=sflag, size = 0x4, scoped, tag = 'scoped memory for tpu_custom_call.1']
    #allocation5 [shape = 's32[1]{0}', space=sflag, size = 0x4, scoped, tag = 'scoped memory for tpu_custom_call.1']
    #allocation6 [shape = 'u8[16384]{0}', space=vmem, size = 0x4000, scoped, tag = 'input window, operand 1, single buffered']
    #allocation7 [shape = 's32[1]{0}', space=sflag, size = 0x4, scoped, tag = 'scoped memory for tpu_custom_call.1']
    #allocation8 [shape = 'u8[512]{0}', space=vmem, size = 0x400, scoped, tag = 'output window, operand 0, single buffered']
    %11 = vsyncpa [#allocation4], 0
    %12 = vsyncpa [#allocation7], 0
    %13 = vsyncpa [#allocation5], 0
    // Predicated region
    $region2: #{tpu_custom_call.1} parent=1 // pred_check
      _
    $region3: #{tpu_custom_call.1} parent=1 // pred_check_branch
      %15 = sbr.rel (0) target = $region5
    $region4: #{tpu_custom_call.1} parent=1 // pred_region
      %17 = vsyncadd [#allocation4], 0
      %s19 = sshll.u32 %s0, 4
      %s20 = int_to_ptr.hbm [resolvable:$true] %s19
      %s21 = sshll.u32 [#allocation3], 4
      %s22 = int_to_ptr.vmem [resolvable:$true] %s21
      %24 = dma.hbm_to_vmem [thread:$0]  %s20, 128, %s22, [#allocation4]
    $region5: #{tpu_custom_call.1} parent=1 // pred_fallthru
      _
    // Predicated region
    $region6: #{tpu_custom_call.1} parent=1 // pred_check
      _
    $region7: #{tpu_custom_call.1} parent=1 // pred_check_branch
      %26 = sbr.rel (0) target = $region9
    $region8: #{tpu_custom_call.1} parent=1 // pred_region
      %28 = vsyncadd [#allocation7], 0
      %s29 = sshll.u32 %s1, 4
      %s30 = int_to_ptr.hbm [resolvable:$true] %s29
      %s31 = sshll.u32 [#allocation6], 4
      %s32 = int_to_ptr.vmem [resolvable:$true] %s31
      %37 = dma.hbm_to_vmem [thread:$0]  %s30, 512, %s32, [#allocation7], 128, 128, 8
    $region9: #{tpu_custom_call.1} parent=1 // pred_fallthru
      _
    // Predicated region
    $region10: #{tpu_custom_call.1} parent=1 // pred_check
      _
    $region11: #{tpu_custom_call.1} parent=1 // pred_check_branch
      %39 = sbr.rel (0) target = $region13
    $region12: #{tpu_custom_call.1} parent=1 // pred_region
      _
    $region13: #{tpu_custom_call.1} parent=1 // pred_fallthru
      _
    // Predicated region
    $region14: #{tpu_custom_call.1} parent=1 // pred_check
      _
    $region15: #{tpu_custom_call.1} parent=1 // pred_check_branch
      %41 = sbr.rel (0) target = $region17
    $region16: #{tpu_custom_call.1} parent=1 // pred_region
      _
    $region17: #{tpu_custom_call.1} parent=1 // pred_fallthru
      _
    // Predicated region
    $region18: #{tpu_custom_call.1} parent=1 // pred_check
      _
    $region19: #{tpu_custom_call.1} parent=1 // pred_check_branch
      %43 = sbr.rel (0) target = $region21
    $region20: #{tpu_custom_call.1} parent=1 // pred_region
      _
    $region21: #{tpu_custom_call.1} parent=1 // pred_fallthru
      _
    // Predicated region
    $region22: #{tpu_custom_call.1} parent=1 // pred_check
      _
    $region23: #{tpu_custom_call.1} parent=1 // pred_check_branch
      %45 = sbr.rel (0) target = $region25
    $region24: #{tpu_custom_call.1} parent=1 // pred_region
      %47 = dma.done [#allocation4], 128
    $region25: #{tpu_custom_call.1} parent=1 // pred_fallthru
      _
    // Predicated region
    $region26: #{tpu_custom_call.1} parent=1 // pred_check
      _
    $region27: #{tpu_custom_call.1} parent=1 // pred_check_branch
      %49 = sbr.rel (0) target = $region29
    $region28: #{tpu_custom_call.1} parent=1 // pred_region
      %51 = dma.done [#allocation7], 512
    $region29: #{tpu_custom_call.1} parent=1 // pred_fallthru
      _
    %v52 = vld [vmem:[#allocation3] sm:$0xff]
    %v53 = vld [vmem:[#allocation6] sm:$0xff]
    %v54 = vld [vmem:[#allocation6 + $0x8] sm:$0xff]
    %v55 = vld [vmem:[#allocation6 + $0x10] sm:$0xff]
    %v56 = vld [vmem:[#allocation6 + $0x18] sm:$0xff]
    %v57 = vld [vmem:[%s2] sm:$0x1]
    %v59 = vperm.slane %v57, 0
    %vm61 = vcmask 261120
    %v63 = vsel %vm61, %v52, 0
    %65 = vmatpush.msra.mxu0 0.0
    %66 = vmatpush.msra.mxu0 0.0
    %67 = vmatpush.msra.mxu0 0.0
    %68 = vmatpush.msra.mxu0 0.0
    %69 = vmatpush.msra.mxu0 0.0
    %70 = vmatpush.msra.mxu0 0.0
    %71 = vmatpush.msra.mxu0 0.0
    %72 = vmatpush.msra.mxu0 0.0
    %73 = vmatpush.msra.mxu0 0.0
    %74 = vmatpush.msra.mxu0 0.0
    %75 = vmatpush.msra.mxu0 0.0
    %76 = vmatpush.msra.mxu0 0.0
    %77 = vmatpush.msra.mxu0 %v56
    %78 = vmatpush.msra.mxu0 %v55
    %79 = vmatpush.msra.mxu0 %v54
    %80 = vmatpush.msra.mxu0 %v53
    %81 = vmatmul.f32.gmra.mxu0 %v63
    %v82 = vpop.f32.mrf.mxu0
    %v83 = vadd.f32 %v59, %v82
    %84 = vdwg.mxu0
    %v85 = vxor.u32 %v83, 2147483648
    %v86 = vmul.f32 %v85, 1.442695
    %v87 = vpow.pop %v86
    %v88 = vadd.f32 %v87, 1.0
    %v89 = vrcp.pop %v88
    %v90 = vmul.f32 %v88, %v89
    %v91 = vsub.f32 1.0, %v90
    %v92 = vmul.f32 %v89, %v91
    %v93 = vadd.f32 %v89, %v92
    %vm94 = vweird.f32 %v88
    %vm95 = vweird.f32 %v89
    %vm96 = vmor %vm94, %vm95
    %v97 = vsel %vm96, %v89, %v93
    %v98 = vand.u32 2147483647, %v88
    %vm99 = vcmp.eq.f32.partialorder %v98, 8.507059e+37
    %v100 = vand.u32 %v88, 2147483648
    %v101 = vor.u32 1.1754944e-38, %v100
    %v102 = vsel %vm99, %v101, %v97
    %v103 = vmul.f32 1.0, %v102
    %v104 = vld [vmem:[%s3] sm:$0x1]
    %s105 = sld [smem:[#allocation2]]
    %v106 = vstv %s105
    %107 = vmatpush.xpose.msra.mxu0 0.0
    %108 = vmatpush.xpose.msra.mxu0 0.0
    %109 = vmatpush.xpose.msra.mxu0 0.0
    %110 = vmatpush.xpose.msra.mxu0 0.0
    %111 = vmatpush.xpose.msra.mxu0 0.0
    %112 = vmatpush.xpose.msra.mxu0 0.0
    %113 = vmatpush.xpose.msra.mxu0 0.0
    %114 = vmatpush.xpose.msra.mxu0 0.0
    %115 = vmatpush.xpose.msra.mxu0 0.0
    %116 = vmatpush.xpose.msra.mxu0 0.0
    %117 = vmatpush.xpose.msra.mxu0 0.0
    %118 = vmatpush.xpose.msra.mxu0 0.0
    %119 = vmatpush.xpose.msra.mxu0 0.0
    %120 = vmatpush.xpose.msra.mxu0 0.0
    %121 = vmatpush.xpose.msra.mxu0 0.0
    %122 = vmatpush.xpose.msra.mxu0 %v103
    %123 = vmatmul.f32.gmra.mxu0 %v104
    %v124 = vpop.f32.mrf.mxu0
    %v125 = vadd.f32 %v106, %v124
    %126 = vdwg.mxu0
    %vm127 = vcmask 57344
    %128 = vst.msk [vmem:[#allocation8] sm:$0x1] %vm127, %v125
    // Predicated region
    $region30: #{tpu_custom_call.1} parent=1 // pred_check
      _
    $region31: #{tpu_custom_call.1} parent=1 // pred_check_branch
      %130 = sbr.rel (0) target = $region33
    $region32: #{tpu_custom_call.1} parent=1 // pred_region
      %132 = vsyncadd [#allocation5], 0
      %s134 = sshll.u32 [#allocation8], 4
      %s135 = int_to_ptr.vmem [resolvable:$true] %s134
      %s136 = sshll.u32 %s5, 4
      %s137 = int_to_ptr.hbm [resolvable:$true] %s136
      %139 = dma.vmem_to_hbm [thread:$0]  %s135, 16, %s137, [#allocation5]
    $region33: #{tpu_custom_call.1} parent=1 // pred_fallthru
      _
    // Predicated region
    $region34: #{tpu_custom_call.1} parent=1 // pred_check
      _
    $region35: #{tpu_custom_call.1} parent=1 // pred_check_branch
      %141 = sbr.rel (0) target = $region37
    $region36: #{tpu_custom_call.1} parent=1 // pred_region
      %143 = dma.done [#allocation5], 16
    $region37: #{tpu_custom_call.1} parent=1 // pred_fallthru
      _
    %144 = vsyncpa [#allocation4], 1
    %145 = vsyncpa [#allocation7], 1
    %146 = vsyncpa [#allocation5], 1

</llo_original>
